<compile_context>
chip_gen: v7x
topology: tpu7x:2x2x1
jax: 0.10.0
libtpu: 0.0.40
codegen_flags: <defaults>
</compile_context>

<pallas_src>
import functools

import jax
import jax.numpy as jnp
from jax import lax
from jax.experimental import pallas as pl
from jax.experimental.pallas import tpu as pltpu

TEMPERATURE = 0.07
LANE = 128                      # pad the tiny 2-wide fc output to one lane
VMEM_LIMIT = 64 * 1024 * 1024   # raise scoped VMEM (v5e default 16M, v6e 32M)


def _round_up(x, m):
    return (x + m - 1) // m * m


def _row_tile(b):
    """Row (query) tile: multiple of 16 (bf16 sublane packing), capped at 256,
    aiming for >=2 row blocks so both v7x TensorCores get work when b > 16."""
    tq = max(16, min(256, _round_up(-(-b // 2), 16)))
    return tq, _round_up(b, tq)


def _key_tile(b):
    """Key tile: multiple of 128 (lane dim of the label row block)."""
    tk = min(256, _round_up(b, 128))
    return tk, _round_up(b, tk)


# ----------------------------------------------------------------------------
# Kernel 1: classification head   logits = cls @ W_pad + b_pad   (lane-dense)
# ----------------------------------------------------------------------------
def _head_kernel(x_ref, w_ref, b_ref, o_ref):
    # x: [TB, H] bf16   w: [H, LANE] bf16 (zero-padded from [H, 2])
    # b: [1, LANE] f32  o: [TB, LANE] f32
    o_ref[...] = (
        jnp.dot(x_ref[...], w_ref[...], preferred_element_type=jnp.float32)
        + b_ref[...]
    )


def head_forward(cls_emb, fc_w_pad, fc_b_pad):
    B, H = cls_emb.shape
    TB, B_pad = _row_tile(B)
    x = cls_emb.astype(jnp.bfloat16)            # bf16 into the MXU
    x = jnp.pad(x, ((0, B_pad - B), (0, 0)))
    logits_pad = pl.pallas_call(
        _head_kernel,
        out_shape=jax.ShapeDtypeStruct((B_pad, LANE), jnp.float32),
        grid=(B_pad // TB,),
        in_specs=[
            pl.BlockSpec((TB, H), lambda i: (i, 0)),      # CLS rows (tiled)
            pl.BlockSpec((H, LANE), lambda i: (0, 0)),    # resident weight
            pl.BlockSpec((1, LANE), lambda i: (0, 0)),    # resident bias
        ],
        out_specs=pl.BlockSpec((TB, LANE), lambda i: (i, 0)),
        compiler_params=pltpu.CompilerParams(
            dimension_semantics=("parallel",),
            vmem_limit_bytes=VMEM_LIMIT),
    )(x, fc_w_pad, fc_b_pad)
    return logits_pad[:B, :2]


# ----------------------------------------------------------------------------
# Kernel 2: contrastive_loss — key-tiled online softmax, per-row loss output
#   sim = softmax(E E^T / T, axis=1); masked sums + log ratios as in PyTorch.
#   Normalization is deferred to the per-row sums; no [B, B] array exists.
# ----------------------------------------------------------------------------
def _closs_kernel(er_ref, ek_ref, lr_ref, lc_ref, pcnt_ref, out_ref,
                  m_sc, l_sc, pos_sc, *, n_valid_keys, tk):
    k = pl.program_id(1)

    @pl.when(k == 0)
    def _():
        m_sc[...] = jnp.full_like(m_sc, -1e30)
        l_sc[...] = jnp.zeros_like(l_sc)
        pos_sc[...] = jnp.zeros_like(pos_sc)

    # Fold 1/temperature into the small [TQ, H] query tile (not the scores).
    q = er_ref[...] * jnp.bfloat16(1.0 / TEMPERATURE)            # bf16
    s = lax.dot_general(q, ek_ref[...], (((1,), (1,)), ((), ())),
                        preferred_element_type=jnp.float32)       # [TQ, TK]

    # Mask padded key columns BEFORE exp: padded labels are 0 and may collide
    # with real labels, but exp(-1e30 - m) == 0 keeps them out of every sum.
    if n_valid_keys is not None:
        col = k * tk + lax.broadcasted_iota(jnp.int32, s.shape, 1)
        s = jnp.where(col < n_valid_keys, s, -1e30)

    m_new = jnp.maximum(m_sc[...], jnp.max(s, axis=1, keepdims=True))
    alpha = jnp.exp(m_sc[...] - m_new)
    p = jnp.exp(s - m_new)
    l_sc[...] = alpha * l_sc[...] + jnp.sum(p, axis=1, keepdims=True)
    pos_sc[...] = alpha * pos_sc[...] + jnp.sum(
        jnp.where(lr_ref[...] == lc_ref[...], p, 0.0), axis=1, keepdims=True)
    m_sc[...] = m_new

    @pl.when(k == pl.num_programs(1) - 1)
    def _():
        row_sum = l_sc[...]
        pos_un = pos_sc[...]
        inv = 1.0 / row_sum                       # exact divide on [TQ, 1]
        pos_sum = pos_un * inv                    # softmax positive mass
        neg_sum = (row_sum - pos_un) * inv        # softmax negative mass
        contrastive = -jnp.log(pos_sum / (neg_sum + 1e-10))
        fair = -jnp.log(pcnt_ref[...] / (neg_sum + 1e-10))
        out_ref[...] = contrastive + fair         # [TQ, 1]


def contrastive_loss(embeddings, labels, protected_attribute):
    B, H = embeddings.shape
    TQ, Bq = _row_tile(B)
    TK, Bk = _key_tile(B)

    e = embeddings.astype(jnp.bfloat16)           # bf16 into the MXU
    lab = labels.reshape(B).astype(jnp.int32)
    prot = protected_attribute.reshape(B).astype(jnp.int32)

    # Fairness numerator depends only on the protected attribute: hoist it to
    # one fused XLA compare+sum instead of a per-tile [TQ, TK] compare+reduce.
    prot_cnt = jnp.sum((prot[:, None] == prot[None, :]).astype(jnp.float32),
                       axis=1)

    e_rows = jnp.pad(e, ((0, Bq - B), (0, 0)))
    e_keys = jnp.pad(e, ((0, Bk - B), (0, 0)))
    lab_r = jnp.pad(lab, (0, Bq - B)).reshape(Bq, 1)
    lab_c = jnp.pad(lab, (0, Bk - B)).reshape(1, Bk)
    pcnt = jnp.pad(prot_cnt, (0, Bq - B)).reshape(Bq, 1)

    per_row = pl.pallas_call(
        functools.partial(_closs_kernel,
                          n_valid_keys=(B if Bk != B else None), tk=TK),
        out_shape=jax.ShapeDtypeStruct((Bq, 1), jnp.float32),
        grid=(Bq // TQ, Bk // TK),
        in_specs=[
            pl.BlockSpec((TQ, H), lambda i, k: (i, 0)),   # query rows (tiled)
            pl.BlockSpec((TK, H), lambda i, k: (k, 0)),   # key rows (tiled)
            pl.BlockSpec((TQ, 1), lambda i, k: (i, 0)),   # labels, row orient.
            pl.BlockSpec((1, TK), lambda i, k: (0, k)),   # labels, col orient.
            pl.BlockSpec((TQ, 1), lambda i, k: (i, 0)),   # hoisted prot count
        ],
        out_specs=pl.BlockSpec((TQ, 1), lambda i, k: (i, 0)),
        scratch_shapes=[pltpu.VMEM((TQ, 1), jnp.float32)] * 3,  # m, l, pos
        compiler_params=pltpu.CompilerParams(
            dimension_semantics=("parallel", "arbitrary"),
            vmem_limit_bytes=VMEM_LIMIT),
    )(e_rows, e_keys, lab_r, lab_c, pcnt)

    # mean(contrastive) + mean(fair) == mean(contrastive + fair) over real rows
    return jnp.mean(per_row[:B, 0])


# ----------------------------------------------------------------------------
# Model wrapper (glue in plain JAX)
# ----------------------------------------------------------------------------
def init_params(key, vocab_size, hidden_size):
    k_emb, k_w = jax.random.split(key)
    fc_w = 0.02 * jax.random.normal(k_w, (hidden_size, 2), jnp.float32)
    fc_b = jnp.zeros((1, 2), jnp.float32)
    return {
        # stand-in embedding table for the PLM
        "emb_table": 0.02 * jax.random.normal(
            k_emb, (vocab_size, hidden_size), jnp.float32),
        "fc_w": fc_w,
        "fc_b": fc_b,
        # lane-padded copies used by the Pallas head kernel (weight in bf16)
        "fc_w_pad": jnp.pad(fc_w, ((0, 0), (0, LANE - 2))).astype(jnp.bfloat16),
        "fc_b_pad": jnp.pad(fc_b, ((0, 0), (0, LANE - 2))),
    }


def forward(params, input_ids, attention_mask):
    # TODO(synk): the pretrained AutoModel encoder cannot be reproduced here; a
    # deterministic embedding lookup masked by attention_mask stands in for
    # plm(...).last_hidden_state.
    hs = params["emb_table"][input_ids] * attention_mask[..., None].astype(jnp.float32)
    # CLS slice in the wrapper so only [B, H] (never [B, S, H]) reaches a kernel.
    sequence_output = hs[:, 0, :]
    logits = head_forward(sequence_output, params["fc_w_pad"], params["fc_b_pad"])
    return logits, sequence_output


# ----------------------------------------------------------------------------
# main
# ----------------------------------------------------------------------------
if __name__ == "__main__":
    B, S, H, V = 8, 8, 128, 64
    key = jax.random.PRNGKey(0)
    k_p, k_ids, k_lab, k_prot = jax.random.split(key, 4)

    params = init_params(k_p, V, H)
    input_ids = jax.random.randint(k_ids, (B, S), 0, V, dtype=jnp.int32)
    attention_mask = jnp.ones((B, S), dtype=jnp.int32)
    labels = jax.random.randint(k_lab, (B,), 0, 2, dtype=jnp.int32)
    protected = jax.random.randint(k_prot, (B,), 0, 2, dtype=jnp.int32)

    logits, seq_out = forward(params, input_ids, attention_mask)
    loss = contrastive_loss(seq_out, labels, protected)
    jax.block_until_ready((logits, seq_out, loss))

    # Pure-JAX reference (same bf16 input quantization the kernels apply)
    hs_ref = params["emb_table"][input_ids] * attention_mask[..., None].astype(jnp.float32)
    cls_ref = hs_ref[:, 0, :]
    cls_bf = cls_ref.astype(jnp.bfloat16).astype(jnp.float32)
    w_bf = params["fc_w"].astype(jnp.bfloat16).astype(jnp.float32)
    logits_ref = cls_bf @ w_bf + params["fc_b"]

    q_bf = (cls_ref.astype(jnp.bfloat16)
            * jnp.bfloat16(1.0 / TEMPERATURE)).astype(jnp.float32)
    sim_ref = jax.nn.softmax(q_bf @ cls_bf.T, axis=1)
    pos_m = (labels[:, None] == labels[None, :]).astype(jnp.float32)
    neg_m = 1.0 - pos_m
    pos_s = (sim_ref * pos_m).sum(1)
    neg_s = (sim_ref * neg_m).sum(1)
    cl_ref = -jnp.log(pos_s / (neg_s + 1e-10))
    prot_m = (protected[:, None] == protected[None, :]).astype(jnp.float32)
    fair_ref = -jnp.log(prot_m.sum(1) / (neg_s + 1e-10))
    loss_ref = cl_ref.mean() + fair_ref.mean()

    # Full-f32 reference of the original PyTorch math (loose bound: bf16 inputs)
    sim_f32 = jax.nn.softmax((cls_ref @ cls_ref.T) / TEMPERATURE, axis=1)
    pos_f = (sim_f32 * pos_m).sum(1)
    neg_f = (sim_f32 * neg_m).sum(1)
    loss_f32 = (-jnp.log(pos_f / (neg_f + 1e-10))).mean() + \
               (-jnp.log(prot_m.sum(1) / (neg_f + 1e-10))).mean()

    assert jnp.allclose(logits, logits_ref, atol=1e-4, rtol=1e-3), "logits mismatch"
    assert jnp.allclose(seq_out, cls_ref, atol=1e-6), "sequence_output mismatch"
    assert jnp.allclose(loss, loss_ref, atol=2e-3, rtol=2e-3), "loss mismatch"
    assert jnp.allclose(loss, loss_f32, atol=5e-2, rtol=5e-2), "loss far from f32 reference"

    print("KERNEL_OK")
</pallas_src>

<mosaic_0001>
module attributes {stable_mosaic.version = 11 : i64} {
  func.func @_head_kernel(%arg0: i32, %arg1: memref<16x128xbf16, #tpu.memory_space<vmem>>, %arg2: memref<128x128xbf16, #tpu.memory_space<vmem>>, %arg3: memref<1x128xf32, #tpu.memory_space<vmem>>, %arg4: memref<16x128xf32, #tpu.memory_space<vmem>>) attributes {dimension_semantics = [#tpu.dimension_semantics<parallel>], iteration_bounds = array<i64: 1>, scalar_prefetch = 0 : i64, scratch_operands = 0 : i64, tpu.core_type = #tpu.core_type<tc>, window_params = [{transform_indices = @transform_0, window_bounds = array<i64: 16, 128>}, {pipeline_mode = #tpu.pipeline_mode<synchronous>, transform_indices = @transform_1, window_bounds = array<i64: 128, 128>}, {pipeline_mode = #tpu.pipeline_mode<synchronous>, transform_indices = @transform_2, window_bounds = array<i64: 1, 128>}, {transform_indices = @transform_3, window_bounds = array<i64: 16, 128>}]} {
    %c0 = arith.constant 0 : index
    %c0_0 = arith.constant 0 : index
    %0 = vector.load %arg1[%c0, %c0_0] : memref<16x128xbf16, #tpu.memory_space<vmem>>, vector<16x128xbf16>
    %c0_1 = arith.constant 0 : index
    %c0_2 = arith.constant 0 : index
    %1 = vector.load %arg2[%c0_1, %c0_2] : memref<128x128xbf16, #tpu.memory_space<vmem>>, vector<128x128xbf16>
    %cst = arith.constant dense<0.000000e+00> : vector<16x128xf32>
    %2 = tpu.matmul %0, %1, %cst {dimension_numbers = #tpu.dot_dimension_numbers<[1], [0], [0], [1], [0, 0, 1, 1], [], []>} : vector<16x128xbf16>, vector<128x128xbf16>, vector<16x128xf32> -> vector<16x128xf32>
    %c0_3 = arith.constant 0 : index
    %c0_4 = arith.constant 0 : index
    %3 = vector.load %arg3[%c0_3, %c0_4] : memref<1x128xf32, #tpu.memory_space<vmem>>, vector<1x128xf32>
    %4 = vector.broadcast %3 : vector<1x128xf32> to vector<16x128xf32>
    %5 = arith.addf %2, %4 : vector<16x128xf32>
    %c0_5 = arith.constant 0 : index
    %c0_6 = arith.constant 0 : index
    %6 = vector.load %arg4[%c0_5, %c0_6] : memref<16x128xf32, #tpu.memory_space<vmem>>, vector<16x128xf32>
    tpu.vector_store %arg4[%c0_5, %c0_6], %5 {strides = array<i32>} : memref<16x128xf32, #tpu.memory_space<vmem>>, vector<16x128xf32>,
    return
  }
  func.func @transform_0(%arg0: i32) -> (i32, i32) {
    %c0_i32 = arith.constant 0 : i32
    %c0_i32_0 = arith.constant 0 : i32
    return %arg0, %c0_i32 : i32, i32
  }
  func.func @transform_1(%arg0: i32) -> (i32, i32) {
    %c0_i32 = arith.constant 0 : i32
    %c0_i32_0 = arith.constant 0 : i32
    %c0_i32_1 = arith.constant 0 : i32
    return %c0_i32, %c0_i32_0 : i32, i32
  }
  func.func @transform_2(%arg0: i32) -> (i32, i32) {
    %c0_i32 = arith.constant 0 : i32
    %c0_i32_0 = arith.constant 0 : i32
    %c0_i32_1 = arith.constant 0 : i32
    return %c0_i32, %c0_i32_0 : i32, i32
  }
  func.func @transform_3(%arg0: i32) -> (i32, i32) {
    %c0_i32 = arith.constant 0 : i32
    %c0_i32_0 = arith.constant 0 : i32
    return %arg0, %c0_i32 : i32, i32
  }
}

</mosaic_0001>

<llo_original>
// kernel: tpu_custom_call.1
$region0: #{tpu_custom_call.1}
  #allocation0 [shape = 'u32[]', space=smem, size = 0x4, offset = 0x4, fixed_abs, tag = 'smem constant byte address 0x4 - core index']
  #allocation1 [shape = 'u32[144,128]{1,0:T(1,128)}', space=vmem, size = 0x12000, scoped, tag = 'internal scratch']
  %s0 = inlined_call_operand.hbm [shape: bf16[16,128], index: 0, kind: input, shape index: {}]
  %s1 = inlined_call_operand.hbm [shape: bf16[128,128], index: 1, kind: input, shape index: {}]
  %s2 = inlined_call_operand.hbm [shape: f32[1,128], index: 2, kind: input, shape index: {}]
  %s3 = inlined_call_operand.hbm [shape: f32[16,128], index: 3, kind: output, shape index: {}]
  %s4 = sld [smem:[#allocation0]]
  $region34: #{tpu_custom_call.1} parent=0
    _
  %s6 = ssub.s32 1, %s4
  %s7 = scalar_select 0, %s6, %s4
  $region1: #{tpu_custom_call.1} parent=0
    #allocation2 [shape = 'u8[4096]{0}', space=vmem, size = 0x1000, scoped, tag = 'input window, operand 0, single buffered']
    #allocation3 [shape = 's32[1]{0}', space=sflag, size = 0x4, scoped, tag = 'scoped memory for tpu_custom_call.1']
    #allocation4 [shape = 's32[1]{0}', space=sflag, size = 0x4, scoped, tag = 'scoped memory for tpu_custom_call.1']
    #allocation5 [shape = 'u8[32768]{0}', space=vmem, size = 0x8000, scoped, tag = 'input window, operand 1, single buffered']
    #allocation6 [shape = 's32[1]{0}', space=sflag, size = 0x4, scoped, tag = 'scoped memory for tpu_custom_call.1']
    #allocation7 [shape = 'u8[512]{0}', space=vmem, size = 0x400, scoped, tag = 'input window, operand 2, single buffered']
    #allocation8 [shape = 'u8[8192]{0}', space=vmem, size = 0x2000, scoped, tag = 'output window, operand 0, single buffered']
    %8 = vsyncpa [#allocation3], 0
    %9 = vsyncpa [#allocation6], 0
    %10 = vsyncpa [#allocation4], 0
    // Predicated region
    $region2: #{tpu_custom_call.1} parent=1 // pred_check
      _
    $region3: #{tpu_custom_call.1} parent=1 // pred_check_branch
      %12 = sbr.rel (0) target = $region5
    $region4: #{tpu_custom_call.1} parent=1 // pred_region
      %s14 = ssub.s32 128, 128
      %15 = vsyncadd [#allocation3], %s14
      %s16 = sshll.u32 [#allocation2], 4
      %s17 = int_to_ptr.vmem [resolvable:$true] %s16
      %22 = dma.hbm_to_vmem [thread:$0]  %s0, 128, %s17, [#allocation3], 64, 64, 4
    $region5: #{tpu_custom_call.1} parent=1 // pred_fallthru
      _
    // Predicated region
    $region6: #{tpu_custom_call.1} parent=1 // pred_check
      _
    $region7: #{tpu_custom_call.1} parent=1 // pred_check_branch
      %24 = sbr.rel (0) target = $region9
    $region8: #{tpu_custom_call.1} parent=1 // pred_region
      %s26 = ssub.s32 1024, 1024
      %27 = vsyncadd [#allocation6], %s26
      %s28 = sshll.u32 [#allocation5], 4
      %s29 = int_to_ptr.vmem [resolvable:$true] %s28
      %34 = dma.hbm_to_vmem [thread:$0]  %s1, 1024, %s29, [#allocation6], 64, 64, 4
    $region9: #{tpu_custom_call.1} parent=1 // pred_fallthru
      _
    // Predicated region
    $region10: #{tpu_custom_call.1} parent=1 // pred_check
      _
    $region11: #{tpu_custom_call.1} parent=1 // pred_check_branch
      %36 = sbr.rel (0) target = $region13
    $region12: #{tpu_custom_call.1} parent=1 // pred_region
      %s38 = ssub.s32 16, 16
      %39 = vsyncadd [#allocation6], %s38
      %s41 = sshll.u32 [#allocation7], 4
      %s42 = int_to_ptr.vmem [resolvable:$true] %s41
      %44 = dma.hbm_to_vmem [thread:$0]  %s2, 16, %s42, [#allocation6]
    $region13: #{tpu_custom_call.1} parent=1 // pred_fallthru
      _
    // Predicated region
    $region14: #{tpu_custom_call.1} parent=1 // pred_check
      _
    $region15: #{tpu_custom_call.1} parent=1 // pred_check_branch
      %46 = sbr.rel (0) target = $region17
    $region16: #{tpu_custom_call.1} parent=1 // pred_region
      %47 = dma.done [#allocation3], 128
    $region17: #{tpu_custom_call.1} parent=1 // pred_fallthru
      _
    // Predicated region
    $region18: #{tpu_custom_call.1} parent=1 // pred_check
      _
    $region19: #{tpu_custom_call.1} parent=1 // pred_check_branch
      %49 = sbr.rel (0) target = $region21
    $region20: #{tpu_custom_call.1} parent=1 // pred_region
      %50 = dma.done [#allocation6], 1024
    $region21: #{tpu_custom_call.1} parent=1 // pred_fallthru
      _
    // Predicated region
    $region22: #{tpu_custom_call.1} parent=1 // pred_check
      _
    $region23: #{tpu_custom_call.1} parent=1 // pred_check_branch
      %52 = sbr.rel (0) target = $region25
    $region24: #{tpu_custom_call.1} parent=1 // pred_region
      %53 = dma.done [#allocation6], 16
    $region25: #{tpu_custom_call.1} parent=1 // pred_fallthru
      _
    %v55 = vld [vmem:[#allocation2] sm:$0xf]
    %v56 = vld [vmem:[#allocation2 + $0x4] sm:$0xf]
    %v57 = vld [vmem:[#allocation5] sm:$0xf]
    %v58 = vld [vmem:[#allocation5 + $0x4] sm:$0xf]
    %v59 = vld [vmem:[#allocation5 + $0x8] sm:$0xf]
    %v60 = vld [vmem:[#allocation5 + $0xc] sm:$0xf]
    %v61 = vld [vmem:[#allocation5 + $0x10] sm:$0xf]
    %v62 = vld [vmem:[#allocation5 + $0x14] sm:$0xf]
    %v63 = vld [vmem:[#allocation5 + $0x18] sm:$0xf]
    %v64 = vld [vmem:[#allocation5 + $0x1c] sm:$0xf]
    %v65 = vld [vmem:[#allocation5 + $0x20] sm:$0xf]
    %v66 = vld [vmem:[#allocation5 + $0x24] sm:$0xf]
    %v67 = vld [vmem:[#allocation5 + $0x28] sm:$0xf]
    %v68 = vld [vmem:[#allocation5 + $0x2c] sm:$0xf]
    %v69 = vld [vmem:[#allocation5 + $0x30] sm:$0xf]
    %v70 = vld [vmem:[#allocation5 + $0x34] sm:$0xf]
    %v71 = vld [vmem:[#allocation5 + $0x38] sm:$0xf]
    %v72 = vld [vmem:[#allocation5 + $0x3c] sm:$0xf]
    %v73 = vld [vmem:[#allocation7] sm:$0x1]
    %v75 = vlaneseq
    %v76 = vshrl.u32 %v75, 7
    %v77 = vsub.s32 0, %v76
    %v78 = vrot.slane %v73, %v77
    %v82 = vunpack.c.l.b16 %v55
    %v83 = vunpack.c.l.b16 %v56
    %v84 = vpack.c.b16 %v83, %v82
    %v102 = vunpack.c.l.b16 %v57
    %v103 = vunpack.c.l.b16 %v58
    %v104 = vunpack.c.l.b16 %v59
    %v105 = vunpack.c.l.b16 %v60
    %v106 = vunpack.c.l.b16 %v61
    %v107 = vunpack.c.l.b16 %v62
    %v108 = vunpack.c.l.b16 %v63
    %v109 = vunpack.c.l.b16 %v64
    %v110 = vunpack.c.l.b16 %v65
    %v111 = vunpack.c.l.b16 %v66
    %v112 = vunpack.c.l.b16 %v67
    %v113 = vunpack.c.l.b16 %v68
    %v114 = vunpack.c.l.b16 %v69
    %v115 = vunpack.c.l.b16 %v70
    %v116 = vunpack.c.l.b16 %v71
    %v117 = vunpack.c.l.b16 %v72
    %v118 = vpack.c.b16 %v103, %v102
    %v119 = vpack.c.b16 %v105, %v104
    %v120 = vpack.c.b16 %v107, %v106
    %v121 = vpack.c.b16 %v109, %v108
    %v122 = vpack.c.b16 %v111, %v110
    %v123 = vpack.c.b16 %v113, %v112
    %v124 = vpack.c.b16 %v115, %v114
    %v125 = vpack.c.b16 %v117, %v116
    %134 = vmatprep.subr.bf16.mxu0 0
    %135 = vmatpush1.bf16.msra.mxu0 %v118
    %136 = vmatprep.subr.bf16.mxu0 0
    %137 = vmatpush1.bf16.msra.mxu0 %v119
    %138 = vmatprep.subr.bf16.mxu0 0
    %139 = vmatpush1.bf16.msra.mxu0 %v120
    %140 = vmatprep.subr.bf16.mxu0 0
    %141 = vmatpush1.bf16.msra.mxu0 %v121
    %142 = vmatprep.subr.bf16.mxu0 0
    %143 = vmatpush1.bf16.msra.mxu0 %v122
    %144 = vmatprep.subr.bf16.mxu0 0
    %145 = vmatpush1.bf16.msra.mxu0 %v123
    %146 = vmatprep.subr.bf16.mxu0 0
    %147 = vmatpush1.bf16.msra.mxu0 %v124
    %148 = vmatprep.subr.bf16.mxu0 0
    %149 = vmatpush1.bf16.msra.mxu0 %v125
    %150 = vmatprep.subr.bf16.mxu0 0
    %151 = vmatpush1.bf16.msra.mxu0 0
    %152 = vmatprep.subr.bf16.mxu0 0
    %153 = vmatpush1.bf16.msra.mxu0 0
    %154 = vmatprep.subr.bf16.mxu0 0
    %155 = vmatpush1.bf16.msra.mxu0 0
    %156 = vmatprep.subr.bf16.mxu0 0
    %157 = vmatpush1.bf16.msra.mxu0 0
    %158 = vmatprep.subr.bf16.mxu0 0
    %159 = vmatpush1.bf16.msra.mxu0 0
    %160 = vmatprep.subr.bf16.mxu0 0
    %161 = vmatpush1.bf16.msra.mxu0 0
    %162 = vmatprep.subr.bf16.mxu0 0
    %163 = vmatpush1.bf16.msra.mxu0 0
    %164 = vmatprep.subr.bf16.mxu0 0
    %165 = vmatpush1.bf16.msra.mxu0 0
    %166 = vmatprep.mubr.bf16.mxu0 0
    %167 = vmatmul.mubr.bf16.gmra.mrb[0].mxu0 %v84
    %v168 = vpop.f32.mrb[0].mxu0
    %v169 = vadd.f32 %v78, %v168
    %v170 = vpop.f32.mrb[0].mxu0
    %v171 = vpop.f32.mrb[0].mxu0
    %v172 = vadd.f32 %v78, %v171
    %v173 = vpop.f32.mrb[0].mxu0
    %174 = vdwg.mxu0
    %175 = vst [vmem:[#allocation8] sm:$0xff] %v169
    %176 = vst [vmem:[#allocation8 + $0x8] sm:$0xff] %v172
    // Predicated region
    $region26: #{tpu_custom_call.1} parent=1 // pred_check
      _
    $region27: #{tpu_custom_call.1} parent=1 // pred_check_branch
      %178 = sbr.rel (0) target = $region29
    $region28: #{tpu_custom_call.1} parent=1 // pred_region
      %s180 = ssub.s32 256, 256
      %181 = vsyncadd [#allocation4], %s180
      %s182 = sshll.u32 [#allocation8], 4
      %s183 = int_to_ptr.vmem [resolvable:$true] %s182
      %188 = dma.vmem_to_hbm [thread:$0]  %s183, 256, %s3, [#allocation4], 128, 128, 8
    $region29: #{tpu_custom_call.1} parent=1 // pred_fallthru
      _
    // Predicated region
    $region30: #{tpu_custom_call.1} parent=1 // pred_check
      _
    $region31: #{tpu_custom_call.1} parent=1 // pred_check_branch
      %190 = sbr.rel (0) target = $region33
    $region32: #{tpu_custom_call.1} parent=1 // pred_region
      %191 = dma.done [#allocation4], 256
    $region33: #{tpu_custom_call.1} parent=1 // pred_fallthru
      _
    %192 = vsyncpa [#allocation3], 1
    %193 = vsyncpa [#allocation6], 1
    %194 = vsyncpa [#allocation4], 1

</llo_original>
